<compile_context>
chip_gen: v7x
topology: tpu7x:2x2x1
jax: 0.10.0
libtpu: 0.0.40
codegen_flags: <defaults>
</compile_context>

<pallas_src>
import jax
import jax.numpy as jnp
from jax.experimental import pallas as pl
from jax.experimental.pallas import tpu as pltpu


# ----------------------------------------------------------------------------
# Pallas kernel: one tile of (NG gts x TP points); gts on sublanes, points on
# lanes.  Pure VPU/EUP elementwise pass (no MXU).
# ----------------------------------------------------------------------------
def _center_prior_kernel(pts_ref,                       # (8, TP)  rows: x, y, 1/stride
                         gcx_ref, gcy_ref,              # (NG, 1)  gt centers
                         mx_ref, my_ref,                # (NG, 1)  mean[label]
                         nax_ref, nay_ref,              # (NG, 1)  -1/(2*sigma^2)
                         mask_ref,                      # (NG, TP) int8 inside-gt mask
                         out_ref):                      # (NG, TP) float32
    pts = pts_ref[...]
    px = pts[0:1, :]                                    # (1, TP)
    py = pts[1:2, :]
    ist = pts[2:3, :]                                   # 1 / stride (exact)

    gcx = gcx_ref[...]                                  # (NG, 1)
    gcy = gcy_ref[...]
    mx = mx_ref[...]
    my = my_ref[...]
    nax = nax_ref[...]                                  # -1 / (2*sigma_x^2)
    nay = nay_ref[...]                                  # -1 / (2*sigma_y^2)

    # broadcast (1, TP) against (NG, 1) -> (NG, TP); no divides in the body.
    dx = (px - gcx) * ist - mx
    dy = (py - gcy) * ist - my
    w = jnp.exp(dx * dx * nax + dy * dy * nay)
    out_ref[...] = jnp.where(mask_ref[...] != 0, w, 0.0)


# ----------------------------------------------------------------------------
# Wrapper: CenterPrior.forward (force_topk=False path).
# ----------------------------------------------------------------------------
def center_prior_forward(anchor_points_list, gt_bboxes, labels,
                         inside_gt_bbox_mask, mean, sigma,
                         strides=(8, 16, 32, 64, 128)):
    """Returns (center_prior_weights, inside_gt_bbox_mask).

    anchor_points_list : list of (n_lvl_i, 2) float32
    gt_bboxes          : (num_gt, 4) float32, xyxy
    labels             : (num_gt,) int32
    inside_gt_bbox_mask: (num_points, num_gt) bool
    mean, sigma        : (num_classes, 2) float32 parameters
    """
    num_gt = int(labels.shape[0])
    num_points = int(sum(int(p.shape[0]) for p in anchor_points_list))
    if num_gt == 0:
        return (jnp.zeros((num_points, num_gt), jnp.float32),
                inside_gt_bbox_mask)

    points = jnp.concatenate(anchor_points_list, axis=0)          # (P, 2)
    inv_stride = jnp.concatenate([
        jnp.full((int(p.shape[0]),), 1.0 / float(s), jnp.float32)
        for p, s in zip(anchor_points_list, strides)
    ], axis=0)                                                    # (P,)

    gt_cx = (gt_bboxes[:, 0] + gt_bboxes[:, 2]) * 0.5             # (G,)
    gt_cy = (gt_bboxes[:, 1] + gt_bboxes[:, 3]) * 0.5
    inst_mean = mean[labels].astype(jnp.float32)                  # (G, 2)
    inst_sigma = sigma[labels].astype(jnp.float32)                # (G, 2)
    neg_inv_2sig2 = -0.5 / (inst_sigma * inst_sigma)              # exact precompute

    # --- padding / tile selection -------------------------------------------
    NG = pl.cdiv(num_gt, 8) * 8                 # sublane axis (small padding)
    NP = pl.cdiv(num_points, 128) * 128         # lane axis (lane-dense)

    # Lane tile: large enough that per-grid-step overhead vanishes, small
    # enough that the double-buffered working set stays well under the scoped
    # VMEM default on every generation (incl. v7x's 64 MiB VMEM), while
    # leaving several grid steps for v7x megacore sharding.
    bytes_per_lane = NG * (4 + 1) + 8 * 4       # out f32 + mask i8 + packed pts
    tp_cap = (8 * 1024 * 1024) // (2 * bytes_per_lane)
    tp_cap = max(128, (tp_cap // 128) * 128)
    TP = int(min(NP, tp_cap, 4096))
    NP = pl.cdiv(NP, TP) * TP                   # grid divides evenly

    def pad_g(v):
        return jnp.pad(v.astype(jnp.float32),
                       (0, NG - num_gt)).reshape(NG, 1)

    # packed per-point params: row 0 = x, row 1 = y, row 2 = 1/stride
    pts_packed = jnp.zeros((8, NP), jnp.float32)
    pts_packed = pts_packed.at[0, :num_points].set(points[:, 0].astype(jnp.float32))
    pts_packed = pts_packed.at[1, :num_points].set(points[:, 1].astype(jnp.float32))
    pts_packed = pts_packed.at[2, :num_points].set(inv_stride)

    gcx = pad_g(gt_cx)
    gcy = pad_g(gt_cy)
    mx = pad_g(inst_mean[:, 0])
    my = pad_g(inst_mean[:, 1])
    nax = pad_g(neg_inv_2sig2[:, 0])
    nay = pad_g(neg_inv_2sig2[:, 1])

    # int8 mask in (gt, point) orientation; padded entries are 0 -> output 0.
    mask_t = jnp.pad(inside_gt_bbox_mask.astype(jnp.int8).T,
                     ((0, NG - num_gt), (0, NP - num_points)))    # (NG, NP)

    grid = (NP // TP,)
    pts_spec = pl.BlockSpec((8, TP), lambda i: (0, i))
    g_spec = pl.BlockSpec((NG, 1), lambda i: (0, 0))
    mat_spec = pl.BlockSpec((NG, TP), lambda i: (0, i))

    out_padded = pl.pallas_call(
        _center_prior_kernel,
        out_shape=jax.ShapeDtypeStruct((NG, NP), jnp.float32),
        grid=grid,
        in_specs=[pts_spec,
                  g_spec, g_spec, g_spec, g_spec, g_spec, g_spec,
                  mat_spec],
        out_specs=mat_spec,
        compiler_params=pltpu.CompilerParams(
            dimension_semantics=("parallel",)),
    )(pts_packed, gcx, gcy, mx, my, nax, nay, mask_t)

    # back to the module's (num_points, num_gt) orientation
    center_prior_weights = out_padded[:num_gt, :num_points].T
    # TODO(synk): force_topk=True branch (topk + scatter on gts with no inside
    # points) is data-dependent control flow; left out (module default is
    # force_topk=False, where inside_gt_bbox_mask is returned unchanged).
    return center_prior_weights, inside_gt_bbox_mask


# ----------------------------------------------------------------------------
# Pure-JAX reference (matches the PyTorch module math) for a sanity check.
# ----------------------------------------------------------------------------
def center_prior_reference(anchor_points_list, gt_bboxes, labels,
                           inside_gt_bbox_mask, mean, sigma, strides):
    gt_cx = (gt_bboxes[:, 0] + gt_bboxes[:, 2]) * 0.5
    gt_cy = (gt_bboxes[:, 1] + gt_bboxes[:, 3]) * 0.5
    gt_center = jnp.stack([gt_cx, gt_cy], axis=1)[None]           # (1, G, 2)
    inst_mean = mean[labels][None]                                # (1, G, 2)
    inst_sigma = sigma[labels][None]
    outs = []
    for pts, s in zip(anchor_points_list, strides):
        slvl = pts[:, None, :]                                    # (P, 1, 2)
        dist = ((slvl - gt_center) / float(s) - inst_mean) ** 2
        outs.append(jnp.prod(jnp.exp(-dist / (2.0 * inst_sigma ** 2)), axis=-1))
    w = jnp.concatenate(outs, axis=0)
    return jnp.where(inside_gt_bbox_mask, w, 0.0)


# ----------------------------------------------------------------------------
# Demo / self-test.
# ----------------------------------------------------------------------------
def _make_level_points(h, w, stride):
    ys, xs = jnp.meshgrid(jnp.arange(h, dtype=jnp.float32),
                          jnp.arange(w, dtype=jnp.float32), indexing="ij")
    x = (xs.reshape(-1) + 0.5) * stride
    y = (ys.reshape(-1) + 0.5) * stride
    return jnp.stack([x, y], axis=-1)


if __name__ == "__main__":
    key = jax.random.PRNGKey(0)
    k_mean, k_sigma, k_box, k_lab = jax.random.split(key, 4)

    num_classes = 80
    strides = (8, 16, 32)
    # small "image" of 32x32 -> feature maps 4x4, 2x2, 1x1
    anchor_points_list = [
        _make_level_points(4, 4, 8),
        _make_level_points(2, 2, 16),
        _make_level_points(1, 1, 32),
    ]
    num_points = sum(int(p.shape[0]) for p in anchor_points_list)   # 21

    # Parameters (shapes from CenterPrior.__init__).
    mean = jnp.zeros((num_classes, 2), jnp.float32) + \
        0.1 * jax.random.normal(k_mean, (num_classes, 2), jnp.float32)
    sigma = jnp.ones((num_classes, 2), jnp.float32) + \
        0.1 * jax.random.uniform(k_sigma, (num_classes, 2), jnp.float32)

    # Ground-truth instances.
    num_gt = 3
    cxy = jax.random.uniform(k_box, (num_gt, 2), jnp.float32, 6.0, 26.0)
    wh = jax.random.uniform(k_box, (num_gt, 2), jnp.float32, 6.0, 18.0)
    gt_bboxes = jnp.concatenate([cxy - wh / 2, cxy + wh / 2], axis=1)  # xyxy
    labels = jax.random.randint(k_lab, (num_gt,), 0, num_classes, jnp.int32)

    # inside_gt_bbox_mask from geometry (plain-JAX glue, matches mmdet usage).
    pts = jnp.concatenate(anchor_points_list, axis=0)                 # (P, 2)
    x, y = pts[:, 0:1], pts[:, 1:2]
    inside_gt_bbox_mask = ((x >= gt_bboxes[None, :, 0]) &
                           (x <= gt_bboxes[None, :, 2]) &
                           (y >= gt_bboxes[None, :, 1]) &
                           (y <= gt_bboxes[None, :, 3])).reshape(num_points,
                                                                 num_gt)

    weights, out_mask = center_prior_forward(
        anchor_points_list, gt_bboxes, labels, inside_gt_bbox_mask,
        mean, sigma, strides)
    weights = jax.block_until_ready(weights)
    out_mask = jax.block_until_ready(out_mask)

    ref = center_prior_reference(anchor_points_list, gt_bboxes, labels,
                                 inside_gt_bbox_mask, mean, sigma, strides)
    assert weights.shape == (num_points, num_gt)
    assert out_mask.shape == (num_points, num_gt) and out_mask.dtype == jnp.bool_
    assert jnp.allclose(weights, ref, atol=1e-5, rtol=1e-5)

    print("KERNEL_OK")
</pallas_src>

<mosaic_0001>
module attributes {stable_mosaic.version = 11 : i64} {
  func.func @_center_prior_kernel(%arg0: i32, %arg1: memref<8x128xf32, #tpu.memory_space<vmem>>, %arg2: memref<8x1xf32, #tpu.memory_space<vmem>>, %arg3: memref<8x1xf32, #tpu.memory_space<vmem>>, %arg4: memref<8x1xf32, #tpu.memory_space<vmem>>, %arg5: memref<8x1xf32, #tpu.memory_space<vmem>>, %arg6: memref<8x1xf32, #tpu.memory_space<vmem>>, %arg7: memref<8x1xf32, #tpu.memory_space<vmem>>, %arg8: memref<8x128xi8, #tpu.memory_space<vmem>>, %arg9: memref<8x128xf32, #tpu.memory_space<vmem>>) attributes {dimension_semantics = [#tpu.dimension_semantics<parallel>], iteration_bounds = array<i64: 1>, scalar_prefetch = 0 : i64, scratch_operands = 0 : i64, tpu.core_type = #tpu.core_type<tc>, window_params = [{transform_indices = @transform_0, window_bounds = array<i64: 8, 128>}, {pipeline_mode = #tpu.pipeline_mode<synchronous>, transform_indices = @transform_1, window_bounds = array<i64: 8, 1>}, {pipeline_mode = #tpu.pipeline_mode<synchronous>, transform_indices = @transform_2, window_bounds = array<i64: 8, 1>}, {pipeline_mode = #tpu.pipeline_mode<synchronous>, transform_indices = @transform_3, window_bounds = array<i64: 8, 1>}, {pipeline_mode = #tpu.pipeline_mode<synchronous>, transform_indices = @transform_4, window_bounds = array<i64: 8, 1>}, {pipeline_mode = #tpu.pipeline_mode<synchronous>, transform_indices = @transform_5, window_bounds = array<i64: 8, 1>}, {pipeline_mode = #tpu.pipeline_mode<synchronous>, transform_indices = @transform_6, window_bounds = array<i64: 8, 1>}, {transform_indices = @transform_7, window_bounds = array<i64: 8, 128>}, {transform_indices = @transform_8, window_bounds = array<i64: 8, 128>}]} {
    %c0 = arith.constant 0 : index
    %c0_0 = arith.constant 0 : index
    %0 = vector.load %arg1[%c0, %c0_0] : memref<8x128xf32, #tpu.memory_space<vmem>>, vector<8x128xf32>
    %1 = vector.extract_strided_slice %0 {offsets = [0, 0], sizes = [1, 128], strides = [1, 1]} : vector<8x128xf32> to vector<1x128xf32>
    %2 = vector.extract_strided_slice %0 {offsets = [1, 0], sizes = [1, 128], strides = [1, 1]} : vector<8x128xf32> to vector<1x128xf32>
    %3 = vector.extract_strided_slice %0 {offsets = [2, 0], sizes = [1, 128], strides = [1, 1]} : vector<8x128xf32> to vector<1x128xf32>
    %c0_1 = arith.constant 0 : index
    %c0_2 = arith.constant 0 : index
    %4 = vector.load %arg2[%c0_1, %c0_2] : memref<8x1xf32, #tpu.memory_space<vmem>>, vector<8x1xf32>
    %c0_3 = arith.constant 0 : index
    %c0_4 = arith.constant 0 : index
    %5 = vector.load %arg3[%c0_3, %c0_4] : memref<8x1xf32, #tpu.memory_space<vmem>>, vector<8x1xf32>
    %c0_5 = arith.constant 0 : index
    %c0_6 = arith.constant 0 : index
    %6 = vector.load %arg4[%c0_5, %c0_6] : memref<8x1xf32, #tpu.memory_space<vmem>>, vector<8x1xf32>
    %c0_7 = arith.constant 0 : index
    %c0_8 = arith.constant 0 : index
    %7 = vector.load %arg5[%c0_7, %c0_8] : memref<8x1xf32, #tpu.memory_space<vmem>>, vector<8x1xf32>
    %c0_9 = arith.constant 0 : index
    %c0_10 = arith.constant 0 : index
    %8 = vector.load %arg6[%c0_9, %c0_10] : memref<8x1xf32, #tpu.memory_space<vmem>>, vector<8x1xf32>
    %c0_11 = arith.constant 0 : index
    %c0_12 = arith.constant 0 : index
    %9 = vector.load %arg7[%c0_11, %c0_12] : memref<8x1xf32, #tpu.memory_space<vmem>>, vector<8x1xf32>
    %10 = vector.broadcast %1 : vector<1x128xf32> to vector<8x128xf32>
    %11 = vector.broadcast %4 : vector<8x1xf32> to vector<8x128xf32>
    %12 = arith.subf %10, %11 : vector<8x128xf32>
    %13 = vector.broadcast %3 : vector<1x128xf32> to vector<8x128xf32>
    %14 = arith.mulf %12, %13 : vector<8x128xf32>
    %15 = vector.broadcast %6 : vector<8x1xf32> to vector<8x128xf32>
    %16 = arith.subf %14, %15 : vector<8x128xf32>
    %17 = vector.broadcast %2 : vector<1x128xf32> to vector<8x128xf32>
    %18 = vector.broadcast %5 : vector<8x1xf32> to vector<8x128xf32>
    %19 = arith.subf %17, %18 : vector<8x128xf32>
    %20 = vector.broadcast %3 : vector<1x128xf32> to vector<8x128xf32>
    %21 = arith.mulf %19, %20 : vector<8x128xf32>
    %22 = vector.broadcast %7 : vector<8x1xf32> to vector<8x128xf32>
    %23 = arith.subf %21, %22 : vector<8x128xf32>
    %24 = arith.mulf %16, %16 : vector<8x128xf32>
    %25 = vector.broadcast %8 : vector<8x1xf32> to vector<8x128xf32>
    %26 = arith.mulf %24, %25 : vector<8x128xf32>
    %27 = arith.mulf %23, %23 : vector<8x128xf32>
    %28 = vector.broadcast %9 : vector<8x1xf32> to vector<8x128xf32>
    %29 = arith.mulf %27, %28 : vector<8x128xf32>
    %30 = arith.addf %26, %29 : vector<8x128xf32>
    %31 = math.exp %30 : vector<8x128xf32>
    %c0_13 = arith.constant 0 : index
    %c0_14 = arith.constant 0 : index
    %32 = vector.load %arg8[%c0_13, %c0_14] : memref<8x128xi8, #tpu.memory_space<vmem>>, vector<8x128xi8>
    %c0_i8 = arith.constant 0 : i8
    %33 = vector.broadcast %c0_i8 : i8 to vector<8x128xi8>
    %34 = arith.cmpi ne, %32, %33 : vector<8x128xi8>
    %cst = arith.constant 0.000000e+00 : f32
    %35 = vector.broadcast %cst : f32 to vector<8x128xf32>
    %36 = arith.select %34, %31, %35 : vector<8x128xi1>, vector<8x128xf32>
    %c0_15 = arith.constant 0 : index
    %c0_16 = arith.constant 0 : index
    %37 = vector.load %arg9[%c0_15, %c0_16] : memref<8x128xf32, #tpu.memory_space<vmem>>, vector<8x128xf32>
    tpu.vector_store %arg9[%c0_15, %c0_16], %36 {strides = array<i32>} : memref<8x128xf32, #tpu.memory_space<vmem>>, vector<8x128xf32>,
    return
  }
  func.func @transform_0(%arg0: i32) -> (i32, i32) {
    %c0_i32 = arith.constant 0 : i32
    %c0_i32_0 = arith.constant 0 : i32
    return %c0_i32, %arg0 : i32, i32
  }
  func.func @transform_1(%arg0: i32) -> (i32, i32) {
    %c0_i32 = arith.constant 0 : i32
    %c0_i32_0 = arith.constant 0 : i32
    %c0_i32_1 = arith.constant 0 : i32
    return %c0_i32, %c0_i32_0 : i32, i32
  }
  func.func @transform_2(%arg0: i32) -> (i32, i32) {
    %c0_i32 = arith.constant 0 : i32
    %c0_i32_0 = arith.constant 0 : i32
    %c0_i32_1 = arith.constant 0 : i32
    return %c0_i32, %c0_i32_0 : i32, i32
  }
  func.func @transform_3(%arg0: i32) -> (i32, i32) {
    %c0_i32 = arith.constant 0 : i32
    %c0_i32_0 = arith.constant 0 : i32
    %c0_i32_1 = arith.constant 0 : i32
    return %c0_i32, %c0_i32_0 : i32, i32
  }
  func.func @transform_4(%arg0: i32) -> (i32, i32) {
    %c0_i32 = arith.constant 0 : i32
    %c0_i32_0 = arith.constant 0 : i32
    %c0_i32_1 = arith.constant 0 : i32
    return %c0_i32, %c0_i32_0 : i32, i32
  }
  func.func @transform_5(%arg0: i32) -> (i32, i32) {
    %c0_i32 = arith.constant 0 : i32
    %c0_i32_0 = arith.constant 0 : i32
    %c0_i32_1 = arith.constant 0 : i32
    return %c0_i32, %c0_i32_0 : i32, i32
  }
  func.func @transform_6(%arg0: i32) -> (i32, i32) {
    %c0_i32 = arith.constant 0 : i32
    %c0_i32_0 = arith.constant 0 : i32
    %c0_i32_1 = arith.constant 0 : i32
    return %c0_i32, %c0_i32_0 : i32, i32
  }
  func.func @transform_7(%arg0: i32) -> (i32, i32) {
    %c0_i32 = arith.constant 0 : i32
    %c0_i32_0 = arith.constant 0 : i32
    return %c0_i32, %arg0 : i32, i32
  }
  func.func @transform_8(%arg0: i32) -> (i32, i32) {
    %c0_i32 = arith.constant 0 : i32
    %c0_i32_0 = arith.constant 0 : i32
    return %c0_i32, %arg0 : i32, i32
  }
}

</mosaic_0001>

<llo_original>
// kernel: tpu_custom_call.1
$region0: #{tpu_custom_call.1}
  #allocation0 [shape = 'u32[]', space=smem, size = 0x4, offset = 0x4, fixed_abs, tag = 'smem constant byte address 0x4 - core index']
  #allocation1 [shape = 'u32[144,128]{1,0:T(1,128)}', space=vmem, size = 0x12000, scoped, tag = 'internal scratch']
  %s0 = inlined_call_operand.vmem [shape: f32[8,128], index: 0, kind: input, shape index: {}]
  %s1 = inlined_call_operand.vmem [shape: f32[8,1], index: 1, kind: input, shape index: {}]
  %s2 = inlined_call_operand.vmem [shape: f32[8,1], index: 2, kind: input, shape index: {}]
  %s3 = inlined_call_operand.vmem [shape: f32[8,1], index: 3, kind: input, shape index: {}]
  %s4 = inlined_call_operand.vmem [shape: f32[8,1], index: 4, kind: input, shape index: {}]
  %s5 = inlined_call_operand.vmem [shape: f32[8,1], index: 5, kind: input, shape index: {}]
  %s6 = inlined_call_operand.vmem [shape: f32[8,1], index: 6, kind: input, shape index: {}]
  %s7 = inlined_call_operand.vmem [shape: s8[8,128], index: 7, kind: input, shape index: {}]
  %s8 = inlined_call_operand.hbm [shape: f32[8,128], index: 8, kind: output, shape index: {}]
  %s9 = sld [smem:[#allocation0]]
  $region42: #{tpu_custom_call.1} parent=0
    _
  %s11 = ssub.s32 1, %s9
  %s12 = scalar_select 0, %s11, %s9
  $region1: #{tpu_custom_call.1} parent=0
    #allocation2 [shape = 'u8[4096]{0}', space=vmem, size = 0x1000, scoped, tag = 'output window, operand 0, single buffered']
    #allocation3 [shape = 's32[1]{0}', space=sflag, size = 0x4, scoped, tag = 'scoped memory for tpu_custom_call.1']
    %13 = vsyncpa [#allocation3], 0
    // Predicated region
    $region2: #{tpu_custom_call.1} parent=1 // pred_check
      _
    $region3: #{tpu_custom_call.1} parent=1 // pred_check_branch
      %15 = sbr.rel (0) target = $region5
    $region4: #{tpu_custom_call.1} parent=1 // pred_region
      _
    $region5: #{tpu_custom_call.1} parent=1 // pred_fallthru
      _
    // Predicated region
    $region6: #{tpu_custom_call.1} parent=1 // pred_check
      _
    $region7: #{tpu_custom_call.1} parent=1 // pred_check_branch
      %17 = sbr.rel (0) target = $region9
    $region8: #{tpu_custom_call.1} parent=1 // pred_region
      _
    $region9: #{tpu_custom_call.1} parent=1 // pred_fallthru
      _
    // Predicated region
    $region10: #{tpu_custom_call.1} parent=1 // pred_check
      _
    $region11: #{tpu_custom_call.1} parent=1 // pred_check_branch
      %19 = sbr.rel (0) target = $region13
    $region12: #{tpu_custom_call.1} parent=1 // pred_region
      _
    $region13: #{tpu_custom_call.1} parent=1 // pred_fallthru
      _
    // Predicated region
    $region14: #{tpu_custom_call.1} parent=1 // pred_check
      _
    $region15: #{tpu_custom_call.1} parent=1 // pred_check_branch
      %21 = sbr.rel (0) target = $region17
    $region16: #{tpu_custom_call.1} parent=1 // pred_region
      _
    $region17: #{tpu_custom_call.1} parent=1 // pred_fallthru
      _
    // Predicated region
    $region18: #{tpu_custom_call.1} parent=1 // pred_check
      _
    $region19: #{tpu_custom_call.1} parent=1 // pred_check_branch
      %23 = sbr.rel (0) target = $region21
    $region20: #{tpu_custom_call.1} parent=1 // pred_region
      _
    $region21: #{tpu_custom_call.1} parent=1 // pred_fallthru
      _
    // Predicated region
    $region22: #{tpu_custom_call.1} parent=1 // pred_check
      _
    $region23: #{tpu_custom_call.1} parent=1 // pred_check_branch
      %25 = sbr.rel (0) target = $region25
    $region24: #{tpu_custom_call.1} parent=1 // pred_region
      _
    $region25: #{tpu_custom_call.1} parent=1 // pred_fallthru
      _
    // Predicated region
    $region26: #{tpu_custom_call.1} parent=1 // pred_check
      _
    $region27: #{tpu_custom_call.1} parent=1 // pred_check_branch
      %27 = sbr.rel (0) target = $region29
    $region28: #{tpu_custom_call.1} parent=1 // pred_region
      _
    $region29: #{tpu_custom_call.1} parent=1 // pred_fallthru
      _
    // Predicated region
    $region30: #{tpu_custom_call.1} parent=1 // pred_check
      _
    $region31: #{tpu_custom_call.1} parent=1 // pred_check_branch
      %29 = sbr.rel (0) target = $region33
    $region32: #{tpu_custom_call.1} parent=1 // pred_region
      _
    $region33: #{tpu_custom_call.1} parent=1 // pred_fallthru
      _
    %v32 = vld [vmem:[%s0] sm:$0xff]
    %v33 = vld [vmem:[%s1] sm:$0xff]
    %v34 = vld [vmem:[%s2] sm:$0xff]
    %v35 = vld [vmem:[%s3] sm:$0xff]
    %v36 = vld [vmem:[%s4] sm:$0xff]
    %v37 = vld [vmem:[%s5] sm:$0xff]
    %v38 = vld [vmem:[%s6] sm:$0xff]
    %v39 = vlaneseq
    %v40 = vshrl.u32 %v39, 7
    %v41 = vsub.s32 0, %v40
    %v42 = vrot.slane %v32, %v41
    %44 = vset.pattern.permute.xlu0 0
    %45 = vperm.xlu0 %44, %v33
    %v46 = vpop.permute.xlu0 %45
    %v48 = vsub.f32 %v42, %v46
    %v49 = vlaneseq
    %v50 = vshrl.u32 %v49, 7
    %v51 = vsub.s32 2, %v50
    %v52 = vrot.slane %v32, %v51
    %v53 = vmul.f32 %v48, %v52
    %55 = vset.pattern.permute.xlu0 0
    %56 = vperm.xlu0 %55, %v35
    %v57 = vpop.permute.xlu0 %56
    %v59 = vsub.f32 %v53, %v57
    %v60 = vlaneseq
    %v61 = vshrl.u32 %v60, 7
    %v62 = vsub.s32 1, %v61
    %v63 = vrot.slane %v32, %v62
    %65 = vset.pattern.permute.xlu0 0
    %66 = vperm.xlu0 %65, %v34
    %v67 = vpop.permute.xlu0 %66
    %v69 = vsub.f32 %v63, %v67
    %v70 = vmul.f32 %v69, %v52
    %72 = vset.pattern.permute.xlu0 0
    %73 = vperm.xlu0 %72, %v36
    %v74 = vpop.permute.xlu0 %73
    %v76 = vsub.f32 %v70, %v74
    %v77 = vmul.f32 %v59, %v59
    %79 = vset.pattern.permute.xlu0 0
    %80 = vperm.xlu0 %79, %v37
    %v81 = vpop.permute.xlu0 %80
    %v83 = vmul.f32 %v77, %v81
    %v84 = vmul.f32 %v76, %v76
    %86 = vset.pattern.permute.xlu0 0
    %87 = vperm.xlu0 %86, %v38
    %v88 = vpop.permute.xlu0 %87
    %v90 = vmul.f32 %v84, %v88
    %v91 = vadd.f32 %v83, %v90
    %v92 = vmul.f32 %v91, 1.442695
    %v93 = vpow.pop %v92
    %v94 = vld [vmem:[%s7] sm:$0x3]
    %vm95 = vnez %v94
    %v96 = vsel %vm95, 16843009, 0
    %v97 = vunpack.c.0.s8 %v96
    %vm98 = vcmp.ne.s32.totalorder %v97, 0
    %v99 = vsel %vm98, %v93, 0.0
    %100 = vst [vmem:[#allocation2] sm:$0xff] %v99
    // Predicated region
    $region34: #{tpu_custom_call.1} parent=1 // pred_check
      _
    $region35: #{tpu_custom_call.1} parent=1 // pred_check_branch
      %102 = sbr.rel (0) target = $region37
    $region36: #{tpu_custom_call.1} parent=1 // pred_region
      %s104 = ssub.s32 128, 128
      %105 = vsyncadd [#allocation3], %s104
      %s107 = sshll.u32 [#allocation2], 4
      %s108 = int_to_ptr.vmem [resolvable:$true] %s107
      %110 = dma.vmem_to_hbm [thread:$0]  %s108, 128, %s8, [#allocation3]
    $region37: #{tpu_custom_call.1} parent=1 // pred_fallthru
      _
    // Predicated region
    $region38: #{tpu_custom_call.1} parent=1 // pred_check
      _
    $region39: #{tpu_custom_call.1} parent=1 // pred_check_branch
      %112 = sbr.rel (0) target = $region41
    $region40: #{tpu_custom_call.1} parent=1 // pred_region
      %113 = dma.done [#allocation3], 128
    $region41: #{tpu_custom_call.1} parent=1 // pred_fallthru
      _
    %114 = vsyncpa [#allocation3], 1

</llo_original>
